<compile_context>
chip_gen: v5e
topology: v5e:2x2
jax: 0.10.0
libtpu: 0.0.40
codegen_flags: <defaults>
</compile_context>

<pallas_src>
import jax
import jax.numpy as jnp
from jax.experimental import pallas as pl
from jax.experimental.pallas import tpu as pltpu


def _dma_copy_kernel(x_hbm_ref, o_hbm_ref, sem):
    # Whole-array HBM -> HBM DMA.  Single descriptor, no VMEM staging,
    # no grid, no vector loads/stores — the DMA engine does all the work.
    cp = pltpu.make_async_copy(x_hbm_ref, o_hbm_ref, sem)
    cp.start()
    cp.wait()


def _pallas_materialize(x):
    """Copy `x` into a fresh buffer with one HBM->HBM DMA (shape/dtype/bit-exact)."""
    return pl.pallas_call(
        _dma_copy_kernel,
        out_shape=jax.ShapeDtypeStruct(x.shape, x.dtype),
        in_specs=[pl.BlockSpec(memory_space=pl.ANY)],   # leave input in HBM
        out_specs=pl.BlockSpec(memory_space=pl.ANY),    # output stays in HBM
        scratch_shapes=[pltpu.SemaphoreType.DMA(())],   # one DMA-completion sem
    )(x)


class GetTem:
    """Pallas/JAX equivalent of the PyTorch GET_TEM module.

    forward(x) == x[idx].  The index is a module attribute, so selection is
    purely trace-time.  With materialize=False this is zero-cost (matches
    PyTorch, which returns a reference).  With materialize=True the selected
    feature map is copied into a fresh buffer by a single-DMA Pallas kernel.
    """

    def __init__(self, c1, idx, materialize=True):
        del c1  # unused; kept for signature parity with the PyTorch module
        self.idx = idx
        self.materialize = materialize

    def __call__(self, x):
        out = x[self.idx]  # static Python-level selection (trace time)
        if not self.materialize:
            # TODO(synk): optimal path — no kernel at all; semantics identical.
            return out
        return _pallas_materialize(out)


if __name__ == "__main__":
    # Inputs consistent with the module's docstring:
    #   idx 0 -> (1,  64, 32, 32)
    #   idx 1 -> (1, 128, 16, 16)
    #   idx 2 -> (1, 256,  8,  8)
    key = jax.random.PRNGKey(0)
    k0, k1, k2 = jax.random.split(key, 3)
    feats = [
        jax.random.normal(k0, (1, 64, 32, 32), dtype=jnp.float32),
        jax.random.normal(k1, (1, 128, 16, 16), dtype=jnp.float32),
        jax.random.normal(k2, (1, 256, 8, 8), dtype=jnp.float32),
    ]

    for idx in range(3):
        ref = feats[idx]

        # Materializing path (single-DMA Pallas kernel).
        out = jax.block_until_ready(GetTem(c1=None, idx=idx)(feats))
        assert out.shape == ref.shape, (out.shape, ref.shape)
        assert out.dtype == ref.dtype, (out.dtype, ref.dtype)
        assert bool(jnp.array_equal(out, ref)), f"mismatch (materialize) idx={idx}"

        # Zero-copy path (pure static selection — the optimal implementation).
        out2 = jax.block_until_ready(GetTem(c1=None, idx=idx, materialize=False)(feats))
        assert out2.shape == ref.shape
        assert bool(jnp.array_equal(out2, ref)), f"mismatch (zero-copy) idx={idx}"

    print("KERNEL_OK")
</pallas_src>

<mosaic_0001>
module attributes {stable_mosaic.version = 11 : i64} {
  func.func @_dma_copy_kernel(%arg0: memref<1x64x32x32xf32, #tpu.memory_space<any>>, %arg1: memref<1x64x32x32xf32, #tpu.memory_space<any>>, %arg2: memref<!tpu.dma_semaphore, #tpu.memory_space<semaphore_mem>>) attributes {dimension_semantics = [], scalar_prefetch = 0 : i64, scratch_operands = 1 : i64, tpu.core_type = #tpu.core_type<tc>} {
    tpu.enqueue_dma source(%arg0 : memref<1x64x32x32xf32, #tpu.memory_space<any>>) target(%arg1 : memref<1x64x32x32xf32, #tpu.memory_space<any>>) target_semaphore(%arg2 : memref<!tpu.dma_semaphore, #tpu.memory_space<semaphore_mem>>)
    tpu.wait_dma2 semaphore(%arg2 : memref<!tpu.dma_semaphore, #tpu.memory_space<semaphore_mem>>) src(%arg0 : memref<1x64x32x32xf32, #tpu.memory_space<any>>) dst(%arg1 : memref<1x64x32x32xf32, #tpu.memory_space<any>>)
    return
  }
}

</mosaic_0001>

<llo_original>
// kernel: tpu_custom_call.1
$region0: #{tpu_custom_call.1}
  #allocation0 [shape = 'u32[]', space=smem, size = 0x4, offset = 0x4, fixed_abs, tag = 'smem constant byte address 0x4 - core index']
  #allocation1 [shape = 'u32[72,128]{1,0:T(1,128)}', space=vmem, size = 0x9000, scoped, tag = 'internal scratch']
  #allocation2 [shape = 's32[1]{0}', space=sflag, size = 0x4, scoped, tag = 'scratch operand']
  #allocation3 [shape = 's32[]', space=sflag, size = 0x4, offset = 0, fixed_abs, tag = 'sflag constant byte address 0x0 - dummy sync flag']
  %s0 = inlined_call_operand.vmem [shape: f32[1,64,32,32], index: 0, kind: input, shape index: {}]
  %s1 = inlined_call_operand.vmem [shape: f32[1,64,32,32], index: 1, kind: output, shape index: {}]
  %s2 = sld [smem:[#allocation0]]
  $region21: #{tpu_custom_call.1} parent=0
    _
  %s4 = ssub.s32 1, %s2
  %s5 = scalar_select 0, %s4, %s2
  // Predicated region
  $region2: #{tpu_custom_call.1} parent=0 // pred_check
    _
  $region3: #{tpu_custom_call.1} parent=0 // pred_check_branch
    %7 = sbr.rel (0) target = $region5
  $region4: #{tpu_custom_call.1} parent=0 // pred_region
    loop: start=0, step=1, limit=1
    $region6: #{tpu_custom_call.1} parent=4 // loop_pre_header
      _
    $region7: #{tpu_custom_call.1} parent=4 // loop_header
      %s9 = sphi 0, %s13
      %p10 = scmp.ge.s32.totalorder %s9, 1
      %s14 = sphi %s0, %s0
      %s15 = sphi %s1, %s1
    $region8: #{tpu_custom_call.1} parent=4 // loop_header_branch
      %12 = sbr.rel (%p10) target = $region12
    $region9: #{tpu_custom_call.1} parent=4 // loop_body
      %v16 = vld [vmem:[%s14] sm:$0xff]
      %17 = vst [vmem:[%s15] sm:$0xff] %v16
      %v18 = vld [vmem:[%s14 + $0x8] sm:$0xff]
      %19 = vst [vmem:[%s15 + $0x8] sm:$0xff] %v18
      %v20 = vld [vmem:[%s14 + $0x10] sm:$0xff]
      %21 = vst [vmem:[%s15 + $0x10] sm:$0xff] %v20
      %v22 = vld [vmem:[%s14 + $0x18] sm:$0xff]
      %23 = vst [vmem:[%s15 + $0x18] sm:$0xff] %v22
      %v24 = vld [vmem:[%s14 + $0x20] sm:$0xff]
      %25 = vst [vmem:[%s15 + $0x20] sm:$0xff] %v24
      %v26 = vld [vmem:[%s14 + $0x28] sm:$0xff]
      %27 = vst [vmem:[%s15 + $0x28] sm:$0xff] %v26
      %v28 = vld [vmem:[%s14 + $0x30] sm:$0xff]
      %29 = vst [vmem:[%s15 + $0x30] sm:$0xff] %v28
      %v30 = vld [vmem:[%s14 + $0x38] sm:$0xff]
      %31 = vst [vmem:[%s15 + $0x38] sm:$0xff] %v30
      %v32 = vld [vmem:[%s14 + $0x40] sm:$0xff]
      %33 = vst [vmem:[%s15 + $0x40] sm:$0xff] %v32
      %v34 = vld [vmem:[%s14 + $0x48] sm:$0xff]
      %35 = vst [vmem:[%s15 + $0x48] sm:$0xff] %v34
      %v36 = vld [vmem:[%s14 + $0x50] sm:$0xff]
      %37 = vst [vmem:[%s15 + $0x50] sm:$0xff] %v36
      %v38 = vld [vmem:[%s14 + $0x58] sm:$0xff]
      %39 = vst [vmem:[%s15 + $0x58] sm:$0xff] %v38
      %v40 = vld [vmem:[%s14 + $0x60] sm:$0xff]
      %41 = vst [vmem:[%s15 + $0x60] sm:$0xff] %v40
      %v42 = vld [vmem:[%s14 + $0x68] sm:$0xff]
      %43 = vst [vmem:[%s15 + $0x68] sm:$0xff] %v42
      %v44 = vld [vmem:[%s14 + $0x70] sm:$0xff]
      %45 = vst [vmem:[%s15 + $0x70] sm:$0xff] %v44
      %v46 = vld [vmem:[%s14 + $0x78] sm:$0xff]
      %47 = vst [vmem:[%s15 + $0x78] sm:$0xff] %v46
      %v48 = vld [vmem:[%s14 + $0x80] sm:$0xff]
      %49 = vst [vmem:[%s15 + $0x80] sm:$0xff] %v48
      %v50 = vld [vmem:[%s14 + $0x88] sm:$0xff]
      %51 = vst [vmem:[%s15 + $0x88] sm:$0xff] %v50
      %v52 = vld [vmem:[%s14 + $0x90] sm:$0xff]
      %53 = vst [vmem:[%s15 + $0x90] sm:$0xff] %v52
      %v54 = vld [vmem:[%s14 + $0x98] sm:$0xff]
      %55 = vst [vmem:[%s15 + $0x98] sm:$0xff] %v54
      %v56 = vld [vmem:[%s14 + $0xa0] sm:$0xff]
      %57 = vst [vmem:[%s15 + $0xa0] sm:$0xff] %v56
      %v58 = vld [vmem:[%s14 + $0xa8] sm:$0xff]
      %59 = vst [vmem:[%s15 + $0xa8] sm:$0xff] %v58
      %v60 = vld [vmem:[%s14 + $0xb0] sm:$0xff]
      %61 = vst [vmem:[%s15 + $0xb0] sm:$0xff] %v60
      %v62 = vld [vmem:[%s14 + $0xb8] sm:$0xff]
      %63 = vst [vmem:[%s15 + $0xb8] sm:$0xff] %v62
      %v64 = vld [vmem:[%s14 + $0xc0] sm:$0xff]
      %65 = vst [vmem:[%s15 + $0xc0] sm:$0xff] %v64
      %v66 = vld [vmem:[%s14 + $0xc8] sm:$0xff]
      %67 = vst [vmem:[%s15 + $0xc8] sm:$0xff] %v66
      %v68 = vld [vmem:[%s14 + $0xd0] sm:$0xff]
      %69 = vst [vmem:[%s15 + $0xd0] sm:$0xff] %v68
      %v70 = vld [vmem:[%s14 + $0xd8] sm:$0xff]
      %71 = vst [vmem:[%s15 + $0xd8] sm:$0xff] %v70
      %v72 = vld [vmem:[%s14 + $0xe0] sm:$0xff]
      %73 = vst [vmem:[%s15 + $0xe0] sm:$0xff] %v72
      %v74 = vld [vmem:[%s14 + $0xe8] sm:$0xff]
      %75 = vst [vmem:[%s15 + $0xe8] sm:$0xff] %v74
      %v76 = vld [vmem:[%s14 + $0xf0] sm:$0xff]
      %77 = vst [vmem:[%s15 + $0xf0] sm:$0xff] %v76
      %v78 = vld [vmem:[%s14 + $0xf8] sm:$0xff]
      %79 = vst [vmem:[%s15 + $0xf8] sm:$0xff] %v78
      %v80 = vld [vmem:[%s14 + $0x100] sm:$0xff]
      %81 = vst [vmem:[%s15 + $0x100] sm:$0xff] %v80
      %v82 = vld [vmem:[%s14 + $0x108] sm:$0xff]
      %83 = vst [vmem:[%s15 + $0x108] sm:$0xff] %v82
      %v84 = vld [vmem:[%s14 + $0x110] sm:$0xff]
      %85 = vst [vmem:[%s15 + $0x110] sm:$0xff] %v84
      %v86 = vld [vmem:[%s14 + $0x118] sm:$0xff]
      %87 = vst [vmem:[%s15 + $0x118] sm:$0xff] %v86
      %v88 = vld [vmem:[%s14 + $0x120] sm:$0xff]
      %89 = vst [vmem:[%s15 + $0x120] sm:$0xff] %v88
      %v90 = vld [vmem:[%s14 + $0x128] sm:$0xff]
      %91 = vst [vmem:[%s15 + $0x128] sm:$0xff] %v90
      %v92 = vld [vmem:[%s14 + $0x130] sm:$0xff]
      %93 = vst [vmem:[%s15 + $0x130] sm:$0xff] %v92
      %v94 = vld [vmem:[%s14 + $0x138] sm:$0xff]
      %95 = vst [vmem:[%s15 + $0x138] sm:$0xff] %v94
      %v96 = vld [vmem:[%s14 + $0x140] sm:$0xff]
      %97 = vst [vmem:[%s15 + $0x140] sm:$0xff] %v96
      %v98 = vld [vmem:[%s14 + $0x148] sm:$0xff]
      %99 = vst [vmem:[%s15 + $0x148] sm:$0xff] %v98
      %v100 = vld [vmem:[%s14 + $0x150] sm:$0xff]
      %101 = vst [vmem:[%s15 + $0x150] sm:$0xff] %v100
      %v102 = vld [vmem:[%s14 + $0x158] sm:$0xff]
      %103 = vst [vmem:[%s15 + $0x158] sm:$0xff] %v102
      %v104 = vld [vmem:[%s14 + $0x160] sm:$0xff]
      %105 = vst [vmem:[%s15 + $0x160] sm:$0xff] %v104
      %v106 = vld [vmem:[%s14 + $0x168] sm:$0xff]
      %107 = vst [vmem:[%s15 + $0x168] sm:$0xff] %v106
      %v108 = vld [vmem:[%s14 + $0x170] sm:$0xff]
      %109 = vst [vmem:[%s15 + $0x170] sm:$0xff] %v108
      %v110 = vld [vmem:[%s14 + $0x178] sm:$0xff]
      %111 = vst [vmem:[%s15 + $0x178] sm:$0xff] %v110
      %v112 = vld [vmem:[%s14 + $0x180] sm:$0xff]
      %113 = vst [vmem:[%s15 + $0x180] sm:$0xff] %v112
      %v114 = vld [vmem:[%s14 + $0x188] sm:$0xff]
      %115 = vst [vmem:[%s15 + $0x188] sm:$0xff] %v114
      %v116 = vld [vmem:[%s14 + $0x190] sm:$0xff]
      %117 = vst [vmem:[%s15 + $0x190] sm:$0xff] %v116
      %v118 = vld [vmem:[%s14 + $0x198] sm:$0xff]
      %119 = vst [vmem:[%s15 + $0x198] sm:$0xff] %v118
      %v120 = vld [vmem:[%s14 + $0x1a0] sm:$0xff]
      %121 = vst [vmem:[%s15 + $0x1a0] sm:$0xff] %v120
      %v122 = vld [vmem:[%s14 + $0x1a8] sm:$0xff]
      %123 = vst [vmem:[%s15 + $0x1a8] sm:$0xff] %v122
      %v124 = vld [vmem:[%s14 + $0x1b0] sm:$0xff]
      %125 = vst [vmem:[%s15 + $0x1b0] sm:$0xff] %v124
      %v126 = vld [vmem:[%s14 + $0x1b8] sm:$0xff]
      %127 = vst [vmem:[%s15 + $0x1b8] sm:$0xff] %v126
      %v128 = vld [vmem:[%s14 + $0x1c0] sm:$0xff]
      %129 = vst [vmem:[%s15 + $0x1c0] sm:$0xff] %v128
      %v130 = vld [vmem:[%s14 + $0x1c8] sm:$0xff]
      %131 = vst [vmem:[%s15 + $0x1c8] sm:$0xff] %v130
      %v132 = vld [vmem:[%s14 + $0x1d0] sm:$0xff]
      %133 = vst [vmem:[%s15 + $0x1d0] sm:$0xff] %v132
      %v134 = vld [vmem:[%s14 + $0x1d8] sm:$0xff]
      %135 = vst [vmem:[%s15 + $0x1d8] sm:$0xff] %v134
      %v136 = vld [vmem:[%s14 + $0x1e0] sm:$0xff]
      %137 = vst [vmem:[%s15 + $0x1e0] sm:$0xff] %v136
      %v138 = vld [vmem:[%s14 + $0x1e8] sm:$0xff]
      %139 = vst [vmem:[%s15 + $0x1e8] sm:$0xff] %v138
      %v140 = vld [vmem:[%s14 + $0x1f0] sm:$0xff]
      %141 = vst [vmem:[%s15 + $0x1f0] sm:$0xff] %v140
      %v142 = vld [vmem:[%s14 + $0x1f8] sm:$0xff]
      %143 = vst [vmem:[%s15 + $0x1f8] sm:$0xff] %v142
      %v144 = vld [vmem:[%s14 + $0x200] sm:$0xff]
      %145 = vst [vmem:[%s15 + $0x200] sm:$0xff] %v144
      %v146 = vld [vmem:[%s14 + $0x208] sm:$0xff]
      %147 = vst [vmem:[%s15 + $0x208] sm:$0xff] %v146
      %v148 = vld [vmem:[%s14 + $0x210] sm:$0xff]
      %149 = vst [vmem:[%s15 + $0x210] sm:$0xff] %v148
      %v150 = vld [vmem:[%s14 + $0x218] sm:$0xff]
      %151 = vst [vmem:[%s15 + $0x218] sm:$0xff] %v150
      %v152 = vld [vmem:[%s14 + $0x220] sm:$0xff]
      %153 = vst [vmem:[%s15 + $0x220] sm:$0xff] %v152
      %v154 = vld [vmem:[%s14 + $0x228] sm:$0xff]
      %155 = vst [vmem:[%s15 + $0x228] sm:$0xff] %v154
      %v156 = vld [vmem:[%s14 + $0x230] sm:$0xff]
      %157 = vst [vmem:[%s15 + $0x230] sm:$0xff] %v156
      %v158 = vld [vmem:[%s14 + $0x238] sm:$0xff]
      %159 = vst [vmem:[%s15 + $0x238] sm:$0xff] %v158
      %v160 = vld [vmem:[%s14 + $0x240] sm:$0xff]
      %161 = vst [vmem:[%s15 + $0x240] sm:$0xff] %v160
      %v162 = vld [vmem:[%s14 + $0x248] sm:$0xff]
      %163 = vst [vmem:[%s15 + $0x248] sm:$0xff] %v162
      %v164 = vld [vmem:[%s14 + $0x250] sm:$0xff]
      %165 = vst [vmem:[%s15 + $0x250] sm:$0xff] %v164
      %v166 = vld [vmem:[%s14 + $0x258] sm:$0xff]
      %167 = vst [vmem:[%s15 + $0x258] sm:$0xff] %v166
      %v168 = vld [vmem:[%s14 + $0x260] sm:$0xff]
      %169 = vst [vmem:[%s15 + $0x260] sm:$0xff] %v168
      %v170 = vld [vmem:[%s14 + $0x268] sm:$0xff]
      %171 = vst [vmem:[%s15 + $0x268] sm:$0xff] %v170
      %v172 = vld [vmem:[%s14 + $0x270] sm:$0xff]
      %173 = vst [vmem:[%s15 + $0x270] sm:$0xff] %v172
      %v174 = vld [vmem:[%s14 + $0x278] sm:$0xff]
      %175 = vst [vmem:[%s15 + $0x278] sm:$0xff] %v174
      %v176 = vld [vmem:[%s14 + $0x280] sm:$0xff]
      %177 = vst [vmem:[%s15 + $0x280] sm:$0xff] %v176
      %v178 = vld [vmem:[%s14 + $0x288] sm:$0xff]
      %179 = vst [vmem:[%s15 + $0x288] sm:$0xff] %v178
      %v180 = vld [vmem:[%s14 + $0x290] sm:$0xff]
      %181 = vst [vmem:[%s15 + $0x290] sm:$0xff] %v180
      %v182 = vld [vmem:[%s14 + $0x298] sm:$0xff]
      %183 = vst [vmem:[%s15 + $0x298] sm:$0xff] %v182
      %v184 = vld [vmem:[%s14 + $0x2a0] sm:$0xff]
      %185 = vst [vmem:[%s15 + $0x2a0] sm:$0xff] %v184
      %v186 = vld [vmem:[%s14 + $0x2a8] sm:$0xff]
      %187 = vst [vmem:[%s15 + $0x2a8] sm:$0xff] %v186
      %v188 = vld [vmem:[%s14 + $0x2b0] sm:$0xff]
      %189 = vst [vmem:[%s15 + $0x2b0] sm:$0xff] %v188
      %v190 = vld [vmem:[%s14 + $0x2b8] sm:$0xff]
      %191 = vst [vmem:[%s15 + $0x2b8] sm:$0xff] %v190
      %v192 = vld [vmem:[%s14 + $0x2c0] sm:$0xff]
      %193 = vst [vmem:[%s15 + $0x2c0] sm:$0xff] %v192
      %v194 = vld [vmem:[%s14 + $0x2c8] sm:$0xff]
      %195 = vst [vmem:[%s15 + $0x2c8] sm:$0xff] %v194
      %v196 = vld [vmem:[%s14 + $0x2d0] sm:$0xff]
      %197 = vst [vmem:[%s15 + $0x2d0] sm:$0xff] %v196
      %v198 = vld [vmem:[%s14 + $0x2d8] sm:$0xff]
      %199 = vst [vmem:[%s15 + $0x2d8] sm:$0xff] %v198
      %v200 = vld [vmem:[%s14 + $0x2e0] sm:$0xff]
      %201 = vst [vmem:[%s15 + $0x2e0] sm:$0xff] %v200
      %v202 = vld [vmem:[%s14 + $0x2e8] sm:$0xff]
      %203 = vst [vmem:[%s15 + $0x2e8] sm:$0xff] %v202
      %v204 = vld [vmem:[%s14 + $0x2f0] sm:$0xff]
      %205 = vst [vmem:[%s15 + $0x2f0] sm:$0xff] %v204
      %v206 = vld [vmem:[%s14 + $0x2f8] sm:$0xff]
      %207 = vst [vmem:[%s15 + $0x2f8] sm:$0xff] %v206
      %v208 = vld [vmem:[%s14 + $0x300] sm:$0xff]
      %209 = vst [vmem:[%s15 + $0x300] sm:$0xff] %v208
      %v210 = vld [vmem:[%s14 + $0x308] sm:$0xff]
      %211 = vst [vmem:[%s15 + $0x308] sm:$0xff] %v210
      %v212 = vld [vmem:[%s14 + $0x310] sm:$0xff]
      %213 = vst [vmem:[%s15 + $0x310] sm:$0xff] %v212
      %v214 = vld [vmem:[%s14 + $0x318] sm:$0xff]
      %215 = vst [vmem:[%s15 + $0x318] sm:$0xff] %v214
      %v216 = vld [vmem:[%s14 + $0x320] sm:$0xff]
      %217 = vst [vmem:[%s15 + $0x320] sm:$0xff] %v216
      %v218 = vld [vmem:[%s14 + $0x328] sm:$0xff]
      %219 = vst [vmem:[%s15 + $0x328] sm:$0xff] %v218
      %v220 = vld [vmem:[%s14 + $0x330] sm:$0xff]
      %221 = vst [vmem:[%s15 + $0x330] sm:$0xff] %v220
      %v222 = vld [vmem:[%s14 + $0x338] sm:$0xff]
      %223 = vst [vmem:[%s15 + $0x338] sm:$0xff] %v222
      %v224 = vld [vmem:[%s14 + $0x340] sm:$0xff]
      %225 = vst [vmem:[%s15 + $0x340] sm:$0xff] %v224
      %v226 = vld [vmem:[%s14 + $0x348] sm:$0xff]
      %227 = vst [vmem:[%s15 + $0x348] sm:$0xff] %v226
      %v228 = vld [vmem:[%s14 + $0x350] sm:$0xff]
      %229 = vst [vmem:[%s15 + $0x350] sm:$0xff] %v228
      %v230 = vld [vmem:[%s14 + $0x358] sm:$0xff]
      %231 = vst [vmem:[%s15 + $0x358] sm:$0xff] %v230
      %v232 = vld [vmem:[%s14 + $0x360] sm:$0xff]
      %233 = vst [vmem:[%s15 + $0x360] sm:$0xff] %v232
      %v234 = vld [vmem:[%s14 + $0x368] sm:$0xff]
      %235 = vst [vmem:[%s15 + $0x368] sm:$0xff] %v234
      %v236 = vld [vmem:[%s14 + $0x370] sm:$0xff]
      %237 = vst [vmem:[%s15 + $0x370] sm:$0xff] %v236
      %v238 = vld [vmem:[%s14 + $0x378] sm:$0xff]
      %239 = vst [vmem:[%s15 + $0x378] sm:$0xff] %v238
      %v240 = vld [vmem:[%s14 + $0x380] sm:$0xff]
      %241 = vst [vmem:[%s15 + $0x380] sm:$0xff] %v240
      %v242 = vld [vmem:[%s14 + $0x388] sm:$0xff]
      %243 = vst [vmem:[%s15 + $0x388] sm:$0xff] %v242
      %v244 = vld [vmem:[%s14 + $0x390] sm:$0xff]
      %245 = vst [vmem:[%s15 + $0x390] sm:$0xff] %v244
      %v246 = vld [vmem:[%s14 + $0x398] sm:$0xff]
      %247 = vst [vmem:[%s15 + $0x398] sm:$0xff] %v246
      %v248 = vld [vmem:[%s14 + $0x3a0] sm:$0xff]
      %249 = vst [vmem:[%s15 + $0x3a0] sm:$0xff] %v248
      %v250 = vld [vmem:[%s14 + $0x3a8] sm:$0xff]
      %251 = vst [vmem:[%s15 + $0x3a8] sm:$0xff] %v250
      %v252 = vld [vmem:[%s14 + $0x3b0] sm:$0xff]
      %253 = vst [vmem:[%s15 + $0x3b0] sm:$0xff] %v252
      %v254 = vld [vmem:[%s14 + $0x3b8] sm:$0xff]
      %255 = vst [vmem:[%s15 + $0x3b8] sm:$0xff] %v254
      %v256 = vld [vmem:[%s14 + $0x3c0] sm:$0xff]
      %257 = vst [vmem:[%s15 + $0x3c0] sm:$0xff] %v256
      %v258 = vld [vmem:[%s14 + $0x3c8] sm:$0xff]
      %259 = vst [vmem:[%s15 + $0x3c8] sm:$0xff] %v258
      %v260 = vld [vmem:[%s14 + $0x3d0] sm:$0xff]
      %261 = vst [vmem:[%s15 + $0x3d0] sm:$0xff] %v260
      %v262 = vld [vmem:[%s14 + $0x3d8] sm:$0xff]
      %263 = vst [vmem:[%s15 + $0x3d8] sm:$0xff] %v262
      %v264 = vld [vmem:[%s14 + $0x3e0] sm:$0xff]
      %265 = vst [vmem:[%s15 + $0x3e0] sm:$0xff] %v264
      %v266 = vld [vmem:[%s14 + $0x3e8] sm:$0xff]
      %267 = vst [vmem:[%s15 + $0x3e8] sm:$0xff] %v266
      %v268 = vld [vmem:[%s14 + $0x3f0] sm:$0xff]
      %269 = vst [vmem:[%s15 + $0x3f0] sm:$0xff] %v268
      %v270 = vld [vmem:[%s14 + $0x3f8] sm:$0xff]
      %271 = vst [vmem:[%s15 + $0x3f8] sm:$0xff] %v270
      %v272 = vld [vmem:[%s14 + $0x400] sm:$0xff]
      %273 = vst [vmem:[%s15 + $0x400] sm:$0xff] %v272
      %v274 = vld [vmem:[%s14 + $0x408] sm:$0xff]
      %275 = vst [vmem:[%s15 + $0x408] sm:$0xff] %v274
      %v276 = vld [vmem:[%s14 + $0x410] sm:$0xff]
      %277 = vst [vmem:[%s15 + $0x410] sm:$0xff] %v276
      %v278 = vld [vmem:[%s14 + $0x418] sm:$0xff]
      %279 = vst [vmem:[%s15 + $0x418] sm:$0xff] %v278
      %v280 = vld [vmem:[%s14 + $0x420] sm:$0xff]
      %281 = vst [vmem:[%s15 + $0x420] sm:$0xff] %v280
      %v282 = vld [vmem:[%s14 + $0x428] sm:$0xff]
      %283 = vst [vmem:[%s15 + $0x428] sm:$0xff] %v282
      %v284 = vld [vmem:[%s14 + $0x430] sm:$0xff]
      %285 = vst [vmem:[%s15 + $0x430] sm:$0xff] %v284
      %v286 = vld [vmem:[%s14 + $0x438] sm:$0xff]
      %287 = vst [vmem:[%s15 + $0x438] sm:$0xff] %v286
      %v288 = vld [vmem:[%s14 + $0x440] sm:$0xff]
      %289 = vst [vmem:[%s15 + $0x440] sm:$0xff] %v288
      %v290 = vld [vmem:[%s14 + $0x448] sm:$0xff]
      %291 = vst [vmem:[%s15 + $0x448] sm:$0xff] %v290
      %v292 = vld [vmem:[%s14 + $0x450] sm:$0xff]
      %293 = vst [vmem:[%s15 + $0x450] sm:$0xff] %v292
      %v294 = vld [vmem:[%s14 + $0x458] sm:$0xff]
      %295 = vst [vmem:[%s15 + $0x458] sm:$0xff] %v294
      %v296 = vld [vmem:[%s14 + $0x460] sm:$0xff]
      %297 = vst [vmem:[%s15 + $0x460] sm:$0xff] %v296
      %v298 = vld [vmem:[%s14 + $0x468] sm:$0xff]
      %299 = vst [vmem:[%s15 + $0x468] sm:$0xff] %v298
      %v300 = vld [vmem:[%s14 + $0x470] sm:$0xff]
      %301 = vst [vmem:[%s15 + $0x470] sm:$0xff] %v300
      %v302 = vld [vmem:[%s14 + $0x478] sm:$0xff]
      %303 = vst [vmem:[%s15 + $0x478] sm:$0xff] %v302
      %v304 = vld [vmem:[%s14 + $0x480] sm:$0xff]
      %305 = vst [vmem:[%s15 + $0x480] sm:$0xff] %v304
      %v306 = vld [vmem:[%s14 + $0x488] sm:$0xff]
      %307 = vst [vmem:[%s15 + $0x488] sm:$0xff] %v306
      %v308 = vld [vmem:[%s14 + $0x490] sm:$0xff]
      %309 = vst [vmem:[%s15 + $0x490] sm:$0xff] %v308
      %v310 = vld [vmem:[%s14 + $0x498] sm:$0xff]
      %311 = vst [vmem:[%s15 + $0x498] sm:$0xff] %v310
      %v312 = vld [vmem:[%s14 + $0x4a0] sm:$0xff]
      %313 = vst [vmem:[%s15 + $0x4a0] sm:$0xff] %v312
      %v314 = vld [vmem:[%s14 + $0x4a8] sm:$0xff]
      %315 = vst [vmem:[%s15 + $0x4a8] sm:$0xff] %v314
      %v316 = vld [vmem:[%s14 + $0x4b0] sm:$0xff]
      %317 = vst [vmem:[%s15 + $0x4b0] sm:$0xff] %v316
      %v318 = vld [vmem:[%s14 + $0x4b8] sm:$0xff]
      %319 = vst [vmem:[%s15 + $0x4b8] sm:$0xff] %v318
      %v320 = vld [vmem:[%s14 + $0x4c0] sm:$0xff]
      %321 = vst [vmem:[%s15 + $0x4c0] sm:$0xff] %v320
      %v322 = vld [vmem:[%s14 + $0x4c8] sm:$0xff]
      %323 = vst [vmem:[%s15 + $0x4c8] sm:$0xff] %v322
      %v324 = vld [vmem:[%s14 + $0x4d0] sm:$0xff]
      %325 = vst [vmem:[%s15 + $0x4d0] sm:$0xff] %v324
      %v326 = vld [vmem:[%s14 + $0x4d8] sm:$0xff]
      %327 = vst [vmem:[%s15 + $0x4d8] sm:$0xff] %v326
      %v328 = vld [vmem:[%s14 + $0x4e0] sm:$0xff]
      %329 = vst [vmem:[%s15 + $0x4e0] sm:$0xff] %v328
      %v330 = vld [vmem:[%s14 + $0x4e8] sm:$0xff]
      %331 = vst [vmem:[%s15 + $0x4e8] sm:$0xff] %v330
      %v332 = vld [vmem:[%s14 + $0x4f0] sm:$0xff]
      %333 = vst [vmem:[%s15 + $0x4f0] sm:$0xff] %v332
      %v334 = vld [vmem:[%s14 + $0x4f8] sm:$0xff]
      %335 = vst [vmem:[%s15 + $0x4f8] sm:$0xff] %v334
      %v336 = vld [vmem:[%s14 + $0x500] sm:$0xff]
      %337 = vst [vmem:[%s15 + $0x500] sm:$0xff] %v336
      %v338 = vld [vmem:[%s14 + $0x508] sm:$0xff]
      %339 = vst [vmem:[%s15 + $0x508] sm:$0xff] %v338
      %v340 = vld [vmem:[%s14 + $0x510] sm:$0xff]
      %341 = vst [vmem:[%s15 + $0x510] sm:$0xff] %v340
      %v342 = vld [vmem:[%s14 + $0x518] sm:$0xff]
      %343 = vst [vmem:[%s15 + $0x518] sm:$0xff] %v342
      %v344 = vld [vmem:[%s14 + $0x520] sm:$0xff]
      %345 = vst [vmem:[%s15 + $0x520] sm:$0xff] %v344
      %v346 = vld [vmem:[%s14 + $0x528] sm:$0xff]
      %347 = vst [vmem:[%s15 + $0x528] sm:$0xff] %v346
      %v348 = vld [vmem:[%s14 + $0x530] sm:$0xff]
      %349 = vst [vmem:[%s15 + $0x530] sm:$0xff] %v348
      %v350 = vld [vmem:[%s14 + $0x538] sm:$0xff]
      %351 = vst [vmem:[%s15 + $0x538] sm:$0xff] %v350
      %v352 = vld [vmem:[%s14 + $0x540] sm:$0xff]
      %353 = vst [vmem:[%s15 + $0x540] sm:$0xff] %v352
      %v354 = vld [vmem:[%s14 + $0x548] sm:$0xff]
      %355 = vst [vmem:[%s15 + $0x548] sm:$0xff] %v354
      %v356 = vld [vmem:[%s14 + $0x550] sm:$0xff]
      %357 = vst [vmem:[%s15 + $0x550] sm:$0xff] %v356
      %v358 = vld [vmem:[%s14 + $0x558] sm:$0xff]
      %359 = vst [vmem:[%s15 + $0x558] sm:$0xff] %v358
      %v360 = vld [vmem:[%s14 + $0x560] sm:$0xff]
      %361 = vst [vmem:[%s15 + $0x560] sm:$0xff] %v360
      %v362 = vld [vmem:[%s14 + $0x568] sm:$0xff]
      %363 = vst [vmem:[%s15 + $0x568] sm:$0xff] %v362
      %v364 = vld [vmem:[%s14 + $0x570] sm:$0xff]
      %365 = vst [vmem:[%s15 + $0x570] sm:$0xff] %v364
      %v366 = vld [vmem:[%s14 + $0x578] sm:$0xff]
      %367 = vst [vmem:[%s15 + $0x578] sm:$0xff] %v366
      %v368 = vld [vmem:[%s14 + $0x580] sm:$0xff]
      %369 = vst [vmem:[%s15 + $0x580] sm:$0xff] %v368
      %v370 = vld [vmem:[%s14 + $0x588] sm:$0xff]
      %371 = vst [vmem:[%s15 + $0x588] sm:$0xff] %v370
      %v372 = vld [vmem:[%s14 + $0x590] sm:$0xff]
      %373 = vst [vmem:[%s15 + $0x590] sm:$0xff] %v372
      %v374 = vld [vmem:[%s14 + $0x598] sm:$0xff]
      %375 = vst [vmem:[%s15 + $0x598] sm:$0xff] %v374
      %v376 = vld [vmem:[%s14 + $0x5a0] sm:$0xff]
      %377 = vst [vmem:[%s15 + $0x5a0] sm:$0xff] %v376
      %v378 = vld [vmem:[%s14 + $0x5a8] sm:$0xff]
      %379 = vst [vmem:[%s15 + $0x5a8] sm:$0xff] %v378
      %v380 = vld [vmem:[%s14 + $0x5b0] sm:$0xff]
      %381 = vst [vmem:[%s15 + $0x5b0] sm:$0xff] %v380
      %v382 = vld [vmem:[%s14 + $0x5b8] sm:$0xff]
      %383 = vst [vmem:[%s15 + $0x5b8] sm:$0xff] %v382
      %v384 = vld [vmem:[%s14 + $0x5c0] sm:$0xff]
      %385 = vst [vmem:[%s15 + $0x5c0] sm:$0xff] %v384
      %v386 = vld [vmem:[%s14 + $0x5c8] sm:$0xff]
      %387 = vst [vmem:[%s15 + $0x5c8] sm:$0xff] %v386
      %v388 = vld [vmem:[%s14 + $0x5d0] sm:$0xff]
      %389 = vst [vmem:[%s15 + $0x5d0] sm:$0xff] %v388
      %v390 = vld [vmem:[%s14 + $0x5d8] sm:$0xff]
      %391 = vst [vmem:[%s15 + $0x5d8] sm:$0xff] %v390
      %v392 = vld [vmem:[%s14 + $0x5e0] sm:$0xff]
      %393 = vst [vmem:[%s15 + $0x5e0] sm:$0xff] %v392
      %v394 = vld [vmem:[%s14 + $0x5e8] sm:$0xff]
      %395 = vst [vmem:[%s15 + $0x5e8] sm:$0xff] %v394
      %v396 = vld [vmem:[%s14 + $0x5f0] sm:$0xff]
      %397 = vst [vmem:[%s15 + $0x5f0] sm:$0xff] %v396
      %v398 = vld [vmem:[%s14 + $0x5f8] sm:$0xff]
      %399 = vst [vmem:[%s15 + $0x5f8] sm:$0xff] %v398
      %v400 = vld [vmem:[%s14 + $0x600] sm:$0xff]
      %401 = vst [vmem:[%s15 + $0x600] sm:$0xff] %v400
      %v402 = vld [vmem:[%s14 + $0x608] sm:$0xff]
      %403 = vst [vmem:[%s15 + $0x608] sm:$0xff] %v402
      %v404 = vld [vmem:[%s14 + $0x610] sm:$0xff]
      %405 = vst [vmem:[%s15 + $0x610] sm:$0xff] %v404
      %v406 = vld [vmem:[%s14 + $0x618] sm:$0xff]
      %407 = vst [vmem:[%s15 + $0x618] sm:$0xff] %v406
      %v408 = vld [vmem:[%s14 + $0x620] sm:$0xff]
      %409 = vst [vmem:[%s15 + $0x620] sm:$0xff] %v408
      %v410 = vld [vmem:[%s14 + $0x628] sm:$0xff]
      %411 = vst [vmem:[%s15 + $0x628] sm:$0xff] %v410
      %v412 = vld [vmem:[%s14 + $0x630] sm:$0xff]
      %413 = vst [vmem:[%s15 + $0x630] sm:$0xff] %v412
      %v414 = vld [vmem:[%s14 + $0x638] sm:$0xff]
      %415 = vst [vmem:[%s15 + $0x638] sm:$0xff] %v414
      %v416 = vld [vmem:[%s14 + $0x640] sm:$0xff]
      %417 = vst [vmem:[%s15 + $0x640] sm:$0xff] %v416
      %v418 = vld [vmem:[%s14 + $0x648] sm:$0xff]
      %419 = vst [vmem:[%s15 + $0x648] sm:$0xff] %v418
      %v420 = vld [vmem:[%s14 + $0x650] sm:$0xff]
      %421 = vst [vmem:[%s15 + $0x650] sm:$0xff] %v420
      %v422 = vld [vmem:[%s14 + $0x658] sm:$0xff]
      %423 = vst [vmem:[%s15 + $0x658] sm:$0xff] %v422
      %v424 = vld [vmem:[%s14 + $0x660] sm:$0xff]
      %425 = vst [vmem:[%s15 + $0x660] sm:$0xff] %v424
      %v426 = vld [vmem:[%s14 + $0x668] sm:$0xff]
      %427 = vst [vmem:[%s15 + $0x668] sm:$0xff] %v426
      %v428 = vld [vmem:[%s14 + $0x670] sm:$0xff]
      %429 = vst [vmem:[%s15 + $0x670] sm:$0xff] %v428
      %v430 = vld [vmem:[%s14 + $0x678] sm:$0xff]
      %431 = vst [vmem:[%s15 + $0x678] sm:$0xff] %v430
      %v432 = vld [vmem:[%s14 + $0x680] sm:$0xff]
      %433 = vst [vmem:[%s15 + $0x680] sm:$0xff] %v432
      %v434 = vld [vmem:[%s14 + $0x688] sm:$0xff]
      %435 = vst [vmem:[%s15 + $0x688] sm:$0xff] %v434
      %v436 = vld [vmem:[%s14 + $0x690] sm:$0xff]
      %437 = vst [vmem:[%s15 + $0x690] sm:$0xff] %v436
      %v438 = vld [vmem:[%s14 + $0x698] sm:$0xff]
      %439 = vst [vmem:[%s15 + $0x698] sm:$0xff] %v438
      %v440 = vld [vmem:[%s14 + $0x6a0] sm:$0xff]
      %441 = vst [vmem:[%s15 + $0x6a0] sm:$0xff] %v440
      %v442 = vld [vmem:[%s14 + $0x6a8] sm:$0xff]
      %443 = vst [vmem:[%s15 + $0x6a8] sm:$0xff] %v442
      %v444 = vld [vmem:[%s14 + $0x6b0] sm:$0xff]
      %445 = vst [vmem:[%s15 + $0x6b0] sm:$0xff] %v444
      %v446 = vld [vmem:[%s14 + $0x6b8] sm:$0xff]
      %447 = vst [vmem:[%s15 + $0x6b8] sm:$0xff] %v446
      %v448 = vld [vmem:[%s14 + $0x6c0] sm:$0xff]
      %449 = vst [vmem:[%s15 + $0x6c0] sm:$0xff] %v448
      %v450 = vld [vmem:[%s14 + $0x6c8] sm:$0xff]
      %451 = vst [vmem:[%s15 + $0x6c8] sm:$0xff] %v450
      %v452 = vld [vmem:[%s14 + $0x6d0] sm:$0xff]
      %453 = vst [vmem:[%s15 + $0x6d0] sm:$0xff] %v452
      %v454 = vld [vmem:[%s14 + $0x6d8] sm:$0xff]
      %455 = vst [vmem:[%s15 + $0x6d8] sm:$0xff] %v454
      %v456 = vld [vmem:[%s14 + $0x6e0] sm:$0xff]
      %457 = vst [vmem:[%s15 + $0x6e0] sm:$0xff] %v456
      %v458 = vld [vmem:[%s14 + $0x6e8] sm:$0xff]
      %459 = vst [vmem:[%s15 + $0x6e8] sm:$0xff] %v458
      %v460 = vld [vmem:[%s14 + $0x6f0] sm:$0xff]
      %461 = vst [vmem:[%s15 + $0x6f0] sm:$0xff] %v460
      %v462 = vld [vmem:[%s14 + $0x6f8] sm:$0xff]
      %463 = vst [vmem:[%s15 + $0x6f8] sm:$0xff] %v462
      %v464 = vld [vmem:[%s14 + $0x700] sm:$0xff]
      %465 = vst [vmem:[%s15 + $0x700] sm:$0xff] %v464
      %v466 = vld [vmem:[%s14 + $0x708] sm:$0xff]
      %467 = vst [vmem:[%s15 + $0x708] sm:$0xff] %v466
      %v468 = vld [vmem:[%s14 + $0x710] sm:$0xff]
      %469 = vst [vmem:[%s15 + $0x710] sm:$0xff] %v468
      %v470 = vld [vmem:[%s14 + $0x718] sm:$0xff]
      %471 = vst [vmem:[%s15 + $0x718] sm:$0xff] %v470
      %v472 = vld [vmem:[%s14 + $0x720] sm:$0xff]
      %473 = vst [vmem:[%s15 + $0x720] sm:$0xff] %v472
      %v474 = vld [vmem:[%s14 + $0x728] sm:$0xff]
      %475 = vst [vmem:[%s15 + $0x728] sm:$0xff] %v474
      %v476 = vld [vmem:[%s14 + $0x730] sm:$0xff]
      %477 = vst [vmem:[%s15 + $0x730] sm:$0xff] %v476
      %v478 = vld [vmem:[%s14 + $0x738] sm:$0xff]
      %479 = vst [vmem:[%s15 + $0x738] sm:$0xff] %v478
      %v480 = vld [vmem:[%s14 + $0x740] sm:$0xff]
      %481 = vst [vmem:[%s15 + $0x740] sm:$0xff] %v480
      %v482 = vld [vmem:[%s14 + $0x748] sm:$0xff]
      %483 = vst [vmem:[%s15 + $0x748] sm:$0xff] %v482
      %v484 = vld [vmem:[%s14 + $0x750] sm:$0xff]
      %485 = vst [vmem:[%s15 + $0x750] sm:$0xff] %v484
      %v486 = vld [vmem:[%s14 + $0x758] sm:$0xff]
      %487 = vst [vmem:[%s15 + $0x758] sm:$0xff] %v486
      %v488 = vld [vmem:[%s14 + $0x760] sm:$0xff]
      %489 = vst [vmem:[%s15 + $0x760] sm:$0xff] %v488
      %v490 = vld [vmem:[%s14 + $0x768] sm:$0xff]
      %491 = vst [vmem:[%s15 + $0x768] sm:$0xff] %v490
      %v492 = vld [vmem:[%s14 + $0x770] sm:$0xff]
      %493 = vst [vmem:[%s15 + $0x770] sm:$0xff] %v492
      %v494 = vld [vmem:[%s14 + $0x778] sm:$0xff]
      %495 = vst [vmem:[%s15 + $0x778] sm:$0xff] %v494
      %v496 = vld [vmem:[%s14 + $0x780] sm:$0xff]
      %497 = vst [vmem:[%s15 + $0x780] sm:$0xff] %v496
      %v498 = vld [vmem:[%s14 + $0x788] sm:$0xff]
      %499 = vst [vmem:[%s15 + $0x788] sm:$0xff] %v498
      %v500 = vld [vmem:[%s14 + $0x790] sm:$0xff]
      %501 = vst [vmem:[%s15 + $0x790] sm:$0xff] %v500
      %v502 = vld [vmem:[%s14 + $0x798] sm:$0xff]
      %503 = vst [vmem:[%s15 + $0x798] sm:$0xff] %v502
      %v504 = vld [vmem:[%s14 + $0x7a0] sm:$0xff]
      %505 = vst [vmem:[%s15 + $0x7a0] sm:$0xff] %v504
      %v506 = vld [vmem:[%s14 + $0x7a8] sm:$0xff]
      %507 = vst [vmem:[%s15 + $0x7a8] sm:$0xff] %v506
      %v508 = vld [vmem:[%s14 + $0x7b0] sm:$0xff]
      %509 = vst [vmem:[%s15 + $0x7b0] sm:$0xff] %v508
      %v510 = vld [vmem:[%s14 + $0x7b8] sm:$0xff]
      %511 = vst [vmem:[%s15 + $0x7b8] sm:$0xff] %v510
      %v512 = vld [vmem:[%s14 + $0x7c0] sm:$0xff]
      %513 = vst [vmem:[%s15 + $0x7c0] sm:$0xff] %v512
      %v514 = vld [vmem:[%s14 + $0x7c8] sm:$0xff]
      %515 = vst [vmem:[%s15 + $0x7c8] sm:$0xff] %v514
      %v516 = vld [vmem:[%s14 + $0x7d0] sm:$0xff]
      %517 = vst [vmem:[%s15 + $0x7d0] sm:$0xff] %v516
      %v518 = vld [vmem:[%s14 + $0x7d8] sm:$0xff]
      %519 = vst [vmem:[%s15 + $0x7d8] sm:$0xff] %v518
      %v520 = vld [vmem:[%s14 + $0x7e0] sm:$0xff]
      %521 = vst [vmem:[%s15 + $0x7e0] sm:$0xff] %v520
      %v522 = vld [vmem:[%s14 + $0x7e8] sm:$0xff]
      %523 = vst [vmem:[%s15 + $0x7e8] sm:$0xff] %v522
      %v524 = vld [vmem:[%s14 + $0x7f0] sm:$0xff]
      %525 = vst [vmem:[%s15 + $0x7f0] sm:$0xff] %v524
      %v526 = vld [vmem:[%s14 + $0x7f8] sm:$0xff]
      %527 = vst [vmem:[%s15 + $0x7f8] sm:$0xff] %v526
    $region10: #{tpu_custom_call.1} parent=4 // loop_footer
      %s13 = sadd.s32 1, %s9
    $region11: #{tpu_custom_call.1} parent=4 // loop_footer_branch
      %8 = sbr.rel target = $region7
    $region12: #{tpu_custom_call.1} parent=4 // loop_exit
      _
  $region5: #{tpu_custom_call.1} parent=0 // pred_fallthru
    _
  // Predicated region
  $region13: #{tpu_custom_call.1} parent=0 // pred_check
    _
  $region14: #{tpu_custom_call.1} parent=0 // pred_check_branch
    %529 = sbr.rel target = $region16
  $region15: #{tpu_custom_call.1} parent=0 // pred_region
    _
  $region16: #{tpu_custom_call.1} parent=0 // pred_fallthru
    _
  // Predicated region
  $region17: #{tpu_custom_call.1} parent=0 // pred_check
    _
  $region18: #{tpu_custom_call.1} parent=0 // pred_check_branch
    %532 = sbr.rel (0) target = $region20
  $region19: #{tpu_custom_call.1} parent=0 // pred_region
    %533 = vsyncadd [#allocation2], 32768
  $region20: #{tpu_custom_call.1} parent=0 // pred_fallthru
    _
  %s534 = smul.u32 1, 64
  %s535 = smul.u32 %s534, 32
  %s536 = smul.u32 %s535, 1
  %s537 = sshll.u32 %s536, 4
  %538 = dma.done [#allocation2], %s537
  %539 = vsyncmov [#allocation2]
  %s540 = vpop.sfrf %539
  %p541 = scmp.eq.s32.totalorder %s540, 0
  %p542 = pneg %p541
  %544 = shalt.err (%p542)

</llo_original>
